<compile_context>
chip_gen: v6e
topology: v6e:2x2x1
jax: 0.10.0
libtpu: 0.0.40
codegen_flags: <defaults>
</compile_context>

<pallas_src>
import jax
import jax.numpy as jnp
from jax.experimental import pallas as pl
from jax.experimental.pallas import tpu as pltpu


def _head_kernel(x_ref, wq_ref, wk_ref, wv_ref, bq_ref, bk_ref, bv_ref, o_ref):
    # x_ref: (bt, N, E)   w*_ref: (E, hd)   b*_ref: (1, hd)   o_ref: (1, bt, N*hd)
    bt, n, e = x_ref.shape
    hd = wq_ref.shape[1]

    # MXU operand dtype follows the caller's input dtype (bf16 in -> bf16 MXU operands,
    # f32 accumulation via preferred_element_type). Softmax math stays f32 regardless.
    mxu_dt = x_ref.dtype

    # Row-batched projections: (bt*N, E) @ (E, hd) x 3. Leading-dim collapse is layout-free.
    x2d = x_ref[...].reshape(bt * n, e)

    def proj(w_ref, b_ref):
        y = jnp.dot(x2d, w_ref[...], preferred_element_type=jnp.float32) + b_ref[0]
        return y.reshape(bt, n, hd)

    q = proj(wq_ref, bq_ref)   # 1/sqrt(E) already folded into Wq/bq by the wrapper
    k = proj(wk_ref, bk_ref)
    v = proj(wv_ref, bv_ref)

    # Scores without materializing k.T: contract the last dims on the MXU (batched over bt).
    s = jnp.einsum("bqd,bkd->bqk", q.astype(mxu_dt), k.astype(mxu_dt),
                   preferred_element_type=jnp.float32)

    # Numerically-stable softmax numerator; normalization deferred until after attn@v.
    m = jnp.max(s, axis=-1, keepdims=True)
    p = jnp.exp(s - m)
    denom = jnp.sum(p, axis=-1, keepdims=True)           # (bt, N, 1)

    # Unnormalized weighted average, then normalize the (bt,N,hd) result (cheaper than
    # scaling the (bt,N,N) block). Approx reciprocal runs on the otherwise idle EUP.
    out = jnp.einsum("bqk,bkd->bqd", p.astype(mxu_dt), v.astype(mxu_dt),
                     preferred_element_type=jnp.float32)
    out = out * pl.reciprocal(denom, approx=True)
    # TODO(synk): attention dropout (attn_p > 0, training mode) omitted.

    # Lane-dense store: (bt, N, hd) -> (bt, N*hd) slab, last dim a large multiple of 128.
    o_ref[...] = out.reshape(1, bt, n * hd).astype(o_ref.dtype)


def _pick_batch_block(batch, seq, embed, head_dim, itemsize, budget_bytes=24 << 20):
    """Largest batch block whose per-step VMEM footprint fits `budget_bytes`.

    Footprint model: double-buffered x/out slabs + (conservatively) double-buffered resident
    weights/biases + f32 intermediates (q/k/v, score block, f32 out). The grid is a serial
    loop on 1-TC parts (v5e/v6e), so we never force >=2 grid steps; a >=2-way split is only
    preferred (v7x megacore) when each step still feeds the MXU with >= 256 rows.
    """
    def step_bytes(bt):
        rows = bt * seq
        io = 2 * itemsize * (rows * embed + rows * head_dim)        # double-buffered x / out
        wts = 2 * itemsize * (3 * embed * head_dim + 3 * head_dim)  # resident weights/biases
        inter = 4 * (3 * rows * head_dim                            # f32 q/k/v
                     + 2 * bt * seq * seq                           # f32 scores (s, p)
                     + rows * head_dim)                             # f32 out before cast
        return io + wts + inter

    fits = [bt for bt in range(1, batch + 1)
            if batch % bt == 0 and step_bytes(bt) <= budget_bytes]
    if not fits:
        return 1, step_bytes(1)
    best = max(fits)
    if batch // best < 2:
        # Prefer a parallel split only if each step still has >= 256 MXU rows (v7x, 2 TCs).
        par = [bt for bt in fits if batch // bt >= 2 and bt * seq >= 256]
        if par:
            best = max(par)
    return best, step_bytes(best)


def head_attention(x, wq, bq, wk, bk, wv, bv):
    """Pallas forward of `Head`: softmax((x@Wq+bq)(x@Wk+bk)^T * E**-0.5) @ (x@Wv+bv)."""
    B, N, E = x.shape
    hd = wq.shape[1]
    scale = float(E) ** -0.5

    # Fold the 1/sqrt(E) scale into the Q projection in f32, then cast back to the parameter
    # dtype (avoids an extra bf16 rounding when weights arrive in bf16).
    wq_s = (wq.astype(jnp.float32) * scale).astype(wq.dtype)
    bq_s = (bq.astype(jnp.float32) * scale).astype(bq.dtype)
    bq2 = bq_s[None, :]
    bk2 = bk[None, :]
    bv2 = bv[None, :]

    itemsize = jnp.dtype(x.dtype).itemsize
    bt, est_bytes = _pick_batch_block(B, N, E, hd, itemsize)
    grid = (B // bt,)

    # Explicit scoped-VMEM limit with headroom (defaults: 16 MiB v5e / 32 MiB v6e+v7x).
    vmem_limit = int(min(64 << 20, max(32 << 20, 2 * est_bytes)))

    # Advisory cost estimate: 3 projections + scores + attn@v; exp per score entry.
    flops = 2 * B * N * E * 3 * hd + 4 * B * N * N * hd + B * N * hd
    bytes_accessed = itemsize * (B * N * E + 3 * E * hd + 3 * hd + B * N * hd)
    cost = pl.CostEstimate(flops=flops, transcendentals=B * N * N,
                           bytes_accessed=bytes_accessed)

    # Output slab is (grid, bt, N*hd): last two block dims equal the full array dims, so any
    # bt is legal, and the N*hd lane dimension keeps stores unmasked (lane-dense).
    out2d = pl.pallas_call(
        _head_kernel,
        out_shape=jax.ShapeDtypeStruct((B // bt, bt, N * hd), x.dtype),
        grid_spec=pltpu.PrefetchScalarGridSpec(
            num_scalar_prefetch=0,
            grid=grid,
            in_specs=[
                pl.BlockSpec((bt, N, E), lambda i: (i, 0, 0)),   # x, batch-blocked
                pl.BlockSpec((E, hd), lambda i: (0, 0)),         # Wq (scaled), resident
                pl.BlockSpec((E, hd), lambda i: (0, 0)),         # Wk, resident
                pl.BlockSpec((E, hd), lambda i: (0, 0)),         # Wv, resident
                pl.BlockSpec((1, hd), lambda i: (0, 0)),         # bq (scaled), resident
                pl.BlockSpec((1, hd), lambda i: (0, 0)),         # bk, resident
                pl.BlockSpec((1, hd), lambda i: (0, 0)),         # bv, resident
            ],
            out_specs=pl.BlockSpec((1, bt, N * hd), lambda i: (i, 0, 0)),
        ),
        compiler_params=pltpu.CompilerParams(
            dimension_semantics=("parallel",),
            vmem_limit_bytes=vmem_limit),
        cost_estimate=cost,
    )(x, wq_s, wk, wv, bq2, bk2, bv2)

    return out2d.reshape(B, N, hd)


def _reference(x, wq, bq, wk, bk, wv, bv):
    # Pure-JAX mirror of the PyTorch forward (dropout = identity; scale = E**-0.5).
    B, N, E = x.shape
    q = x @ wq + bq
    k = x @ wk + bk
    v = x @ wv + bv
    sam = jnp.einsum("bqd,bkd->bqk", q, k) * float(E) ** -0.5
    attn = jax.nn.softmax(sam, axis=-1)
    return jnp.einsum("bqk,bkd->bqd", attn, v)


if __name__ == "__main__":
    # Small shapes consistent with the module: batch=2, patches=8, embed_dim=32, head_dim=32.
    B, N, E, HD = 2, 8, 32, 32
    key = jax.random.PRNGKey(0)
    kx, k1, k2, k3, k4, k5, k6 = jax.random.split(key, 7)

    x = jax.random.normal(kx, (B, N, E), dtype=jnp.float32)
    # Deterministic synthetic parameters (weights stored (in, out) so y = x @ W + b matches
    # nn.Linear applied to a (..., E) tensor).
    wq = jax.random.normal(k1, (E, HD), dtype=jnp.float32) * 0.02
    wk = jax.random.normal(k2, (E, HD), dtype=jnp.float32) * 0.02
    wv = jax.random.normal(k3, (E, HD), dtype=jnp.float32) * 0.02
    bq = jax.random.normal(k4, (HD,), dtype=jnp.float32) * 0.02
    bk = jax.random.normal(k5, (HD,), dtype=jnp.float32) * 0.02
    bv = jax.random.normal(k6, (HD,), dtype=jnp.float32) * 0.02

    out = head_attention(x, wq, bq, wk, bk, wv, bv)
    out = jax.block_until_ready(out)

    ref = _reference(x, wq, bq, wk, bk, wv, bv)
    assert out.shape == (B, N, HD)
    # Tolerance slightly looser than 1e-5 because the softmax uses the EUP approx reciprocal.
    assert jnp.allclose(out, ref, atol=1e-3, rtol=1e-3), "mismatch vs reference"
    print("KERNEL_OK")
</pallas_src>

<mosaic_0001>
module attributes {stable_mosaic.version = 11 : i64} {
  func.func @_head_kernel(%arg0: i32, %arg1: memref<2x8x32xf32, #tpu.memory_space<vmem>>, %arg2: memref<32x32xf32, #tpu.memory_space<vmem>>, %arg3: memref<32x32xf32, #tpu.memory_space<vmem>>, %arg4: memref<32x32xf32, #tpu.memory_space<vmem>>, %arg5: memref<1x32xf32, #tpu.memory_space<vmem>>, %arg6: memref<1x32xf32, #tpu.memory_space<vmem>>, %arg7: memref<1x32xf32, #tpu.memory_space<vmem>>, %arg8: memref<1x2x256xf32, #tpu.memory_space<vmem>>) attributes {dimension_semantics = [#tpu.dimension_semantics<parallel>], iteration_bounds = array<i64: 1>, scalar_prefetch = 0 : i64, scratch_operands = 0 : i64, tpu.core_type = #tpu.core_type<tc>, window_params = [{transform_indices = @transform_0, window_bounds = array<i64: 2, 8, 32>}, {pipeline_mode = #tpu.pipeline_mode<synchronous>, transform_indices = @transform_1, window_bounds = array<i64: 32, 32>}, {pipeline_mode = #tpu.pipeline_mode<synchronous>, transform_indices = @transform_2, window_bounds = array<i64: 32, 32>}, {pipeline_mode = #tpu.pipeline_mode<synchronous>, transform_indices = @transform_3, window_bounds = array<i64: 32, 32>}, {pipeline_mode = #tpu.pipeline_mode<synchronous>, transform_indices = @transform_4, window_bounds = array<i64: 1, 32>}, {pipeline_mode = #tpu.pipeline_mode<synchronous>, transform_indices = @transform_5, window_bounds = array<i64: 1, 32>}, {pipeline_mode = #tpu.pipeline_mode<synchronous>, transform_indices = @transform_6, window_bounds = array<i64: 1, 32>}, {transform_indices = @transform_7, window_bounds = array<i64: 1, 2, 256>}]} {
    %c0 = arith.constant 0 : index
    %c0_0 = arith.constant 0 : index
    %c0_1 = arith.constant 0 : index
    %0 = vector.load %arg1[%c0, %c0_0, %c0_1] : memref<2x8x32xf32, #tpu.memory_space<vmem>>, vector<2x8x32xf32>
    %1 = vector.shape_cast %0 : vector<2x8x32xf32> to vector<16x32xf32>
    %c0_2 = arith.constant 0 : index
    %c0_3 = arith.constant 0 : index
    %2 = vector.load %arg2[%c0_2, %c0_3] : memref<32x32xf32, #tpu.memory_space<vmem>>, vector<32x32xf32>
    %cst = arith.constant dense<0.000000e+00> : vector<16x32xf32>
    %3 = tpu.matmul %1, %2, %cst {dimension_numbers = #tpu.dot_dimension_numbers<[1], [0], [0], [1], [0, 0, 1, 1], [], []>} : vector<16x32xf32>, vector<32x32xf32>, vector<16x32xf32> -> vector<16x32xf32>
    %c0_4 = arith.constant 0 : index
    %c0_5 = arith.constant 0 : index
    %4 = vector.load %arg5[%c0_4, %c0_5] : memref<1x32xf32, #tpu.memory_space<vmem>>, vector<1x32xf32>
    %5 = vector.shape_cast %4 : vector<1x32xf32> to vector<32xf32>
    %6 = vector.shape_cast %5 : vector<32xf32> to vector<1x32xf32>
    %7 = vector.broadcast %6 : vector<1x32xf32> to vector<16x32xf32>
    %8 = arith.addf %3, %7 : vector<16x32xf32>
    %9 = vector.shape_cast %8 : vector<16x32xf32> to vector<2x8x32xf32>
    %c0_6 = arith.constant 0 : index
    %c0_7 = arith.constant 0 : index
    %10 = vector.load %arg3[%c0_6, %c0_7] : memref<32x32xf32, #tpu.memory_space<vmem>>, vector<32x32xf32>
    %cst_8 = arith.constant dense<0.000000e+00> : vector<16x32xf32>
    %11 = tpu.matmul %1, %10, %cst_8 {dimension_numbers = #tpu.dot_dimension_numbers<[1], [0], [0], [1], [0, 0, 1, 1], [], []>} : vector<16x32xf32>, vector<32x32xf32>, vector<16x32xf32> -> vector<16x32xf32>
    %c0_9 = arith.constant 0 : index
    %c0_10 = arith.constant 0 : index
    %12 = vector.load %arg6[%c0_9, %c0_10] : memref<1x32xf32, #tpu.memory_space<vmem>>, vector<1x32xf32>
    %13 = vector.shape_cast %12 : vector<1x32xf32> to vector<32xf32>
    %14 = vector.shape_cast %13 : vector<32xf32> to vector<1x32xf32>
    %15 = vector.broadcast %14 : vector<1x32xf32> to vector<16x32xf32>
    %16 = arith.addf %11, %15 : vector<16x32xf32>
    %17 = vector.shape_cast %16 : vector<16x32xf32> to vector<2x8x32xf32>
    %c0_11 = arith.constant 0 : index
    %c0_12 = arith.constant 0 : index
    %18 = vector.load %arg4[%c0_11, %c0_12] : memref<32x32xf32, #tpu.memory_space<vmem>>, vector<32x32xf32>
    %cst_13 = arith.constant dense<0.000000e+00> : vector<16x32xf32>
    %19 = tpu.matmul %1, %18, %cst_13 {dimension_numbers = #tpu.dot_dimension_numbers<[1], [0], [0], [1], [0, 0, 1, 1], [], []>} : vector<16x32xf32>, vector<32x32xf32>, vector<16x32xf32> -> vector<16x32xf32>
    %c0_14 = arith.constant 0 : index
    %c0_15 = arith.constant 0 : index
    %20 = vector.load %arg7[%c0_14, %c0_15] : memref<1x32xf32, #tpu.memory_space<vmem>>, vector<1x32xf32>
    %21 = vector.shape_cast %20 : vector<1x32xf32> to vector<32xf32>
    %22 = vector.shape_cast %21 : vector<32xf32> to vector<1x32xf32>
    %23 = vector.broadcast %22 : vector<1x32xf32> to vector<16x32xf32>
    %24 = arith.addf %19, %23 : vector<16x32xf32>
    %25 = vector.shape_cast %24 : vector<16x32xf32> to vector<2x8x32xf32>
    "tpu.trace_start"() <{level = 10 : i32, message = "bqd,bkd->bqk"}> : () -> ()
    %cst_16 = arith.constant dense<0.000000e+00> : vector<2x8x8xf32>
    %26 = tpu.matmul %9, %17, %cst_16 {dimension_numbers = #tpu.dot_dimension_numbers<[2], [2], [1], [1], [0, 0, 0, 1, 1, 1], [0], [0]>} : vector<2x8x32xf32>, vector<2x8x32xf32>, vector<2x8x8xf32> -> vector<2x8x8xf32>
    "tpu.trace_stop"() : () -> ()
    %cst_17 = arith.constant dense<0xFF800000> : vector<2x8xf32>
    %27 = vector.multi_reduction <maximumf>, %26, %cst_17 [2] : vector<2x8x8xf32> to vector<2x8xf32>
    %28 = vector.shape_cast %27 : vector<2x8xf32> to vector<2x8x1xf32>
    %29 = vector.broadcast %28 : vector<2x8x1xf32> to vector<2x8x8xf32>
    %30 = arith.subf %26, %29 : vector<2x8x8xf32>
    %31 = math.exp %30 : vector<2x8x8xf32>
    %cst_18 = arith.constant dense<0.000000e+00> : vector<2x8xf32>
    %32 = vector.multi_reduction <add>, %31, %cst_18 [2] : vector<2x8x8xf32> to vector<2x8xf32>
    %33 = vector.shape_cast %32 : vector<2x8xf32> to vector<2x8x1xf32>
    "tpu.trace_start"() <{level = 10 : i32, message = "bqk,bkd->bqd"}> : () -> ()
    %cst_19 = arith.constant dense<0.000000e+00> : vector<2x8x32xf32>
    %34 = tpu.matmul %31, %25, %cst_19 {dimension_numbers = #tpu.dot_dimension_numbers<[2], [1], [1], [2], [0, 0, 0, 1, 1, 2], [0], [0]>} : vector<2x8x8xf32>, vector<2x8x32xf32>, vector<2x8x32xf32> -> vector<2x8x32xf32>
    "tpu.trace_stop"() : () -> ()
    %35 = tpu.reciprocal %33 {approx = true} : vector<2x8x1xf32> -> vector<2x8x1xf32>
    %36 = vector.broadcast %35 : vector<2x8x1xf32> to vector<2x8x32xf32>
    %37 = arith.mulf %34, %36 : vector<2x8x32xf32>
    %38 = vector.shape_cast %37 : vector<2x8x32xf32> to vector<1x2x256xf32>
    %c0_20 = arith.constant 0 : index
    %c0_21 = arith.constant 0 : index
    %c0_22 = arith.constant 0 : index
    %39 = vector.load %arg8[%c0_20, %c0_21, %c0_22] : memref<1x2x256xf32, #tpu.memory_space<vmem>>, vector<1x2x256xf32>
    tpu.vector_store %arg8[%c0_20, %c0_21, %c0_22], %38 {strides = array<i32>} : memref<1x2x256xf32, #tpu.memory_space<vmem>>, vector<1x2x256xf32>,
    return
  }
  func.func @transform_0(%arg0: i32) -> (i32, i32, i32) {
    %c0_i32 = arith.constant 0 : i32
    %c0_i32_0 = arith.constant 0 : i32
    %c0_i32_1 = arith.constant 0 : i32
    return %arg0, %c0_i32, %c0_i32_0 : i32, i32, i32
  }
  func.func @transform_1(%arg0: i32) -> (i32, i32) {
    %c0_i32 = arith.constant 0 : i32
    %c0_i32_0 = arith.constant 0 : i32
    %c0_i32_1 = arith.constant 0 : i32
    return %c0_i32, %c0_i32_0 : i32, i32
  }
  func.func @transform_2(%arg0: i32) -> (i32, i32) {
    %c0_i32 = arith.constant 0 : i32
    %c0_i32_0 = arith.constant 0 : i32
    %c0_i32_1 = arith.constant 0 : i32
    return %c0_i32, %c0_i32_0 : i32, i32
  }
  func.func @transform_3(%arg0: i32) -> (i32, i32) {
    %c0_i32 = arith.constant 0 : i32
    %c0_i32_0 = arith.constant 0 : i32
    %c0_i32_1 = arith.constant 0 : i32
    return %c0_i32, %c0_i32_0 : i32, i32
  }
  func.func @transform_4(%arg0: i32) -> (i32, i32) {
    %c0_i32 = arith.constant 0 : i32
    %c0_i32_0 = arith.constant 0 : i32
    %c0_i32_1 = arith.constant 0 : i32
    return %c0_i32, %c0_i32_0 : i32, i32
  }
  func.func @transform_5(%arg0: i32) -> (i32, i32) {
    %c0_i32 = arith.constant 0 : i32
    %c0_i32_0 = arith.constant 0 : i32
    %c0_i32_1 = arith.constant 0 : i32
    return %c0_i32, %c0_i32_0 : i32, i32
  }
  func.func @transform_6(%arg0: i32) -> (i32, i32) {
    %c0_i32 = arith.constant 0 : i32
    %c0_i32_0 = arith.constant 0 : i32
    %c0_i32_1 = arith.constant 0 : i32
    return %c0_i32, %c0_i32_0 : i32, i32
  }
  func.func @transform_7(%arg0: i32) -> (i32, i32, i32) {
    %c0_i32 = arith.constant 0 : i32
    %c0_i32_0 = arith.constant 0 : i32
    %c0_i32_1 = arith.constant 0 : i32
    return %arg0, %c0_i32, %c0_i32_0 : i32, i32, i32
  }
}

</mosaic_0001>

<llo_original>
// kernel: tpu_custom_call.1
$region0: #{tpu_custom_call.1}
  #allocation0 [shape = 'u32[]', space=smem, size = 0x4, offset = 0x4, fixed_abs, tag = 'smem constant byte address 0x4 - core index']
  #allocation1 [shape = 'u32[144,128]{1,0:T(1,128)}', space=vmem, size = 0x12000, scoped, tag = 'internal scratch']
  %s0 = inlined_call_operand.hbm [shape: f32[2,8,32], index: 0, kind: input, shape index: {}]
  %s1 = inlined_call_operand.hbm [shape: f32[32,32], index: 1, kind: input, shape index: {}]
  %s2 = inlined_call_operand.hbm [shape: f32[32,32], index: 2, kind: input, shape index: {}]
  %s3 = inlined_call_operand.hbm [shape: f32[32,32], index: 3, kind: input, shape index: {}]
  %s4 = inlined_call_operand.vmem [shape: f32[1,32], index: 4, kind: input, shape index: {}]
  %s5 = inlined_call_operand.vmem [shape: f32[1,32], index: 5, kind: input, shape index: {}]
  %s6 = inlined_call_operand.vmem [shape: f32[1,32], index: 6, kind: input, shape index: {}]
  %s7 = inlined_call_operand.hbm [shape: f32[1,2,256], index: 7, kind: output, shape index: {}]
  %s8 = sld [smem:[#allocation0]]
  $region54: #{tpu_custom_call.1} parent=0
    _
  %s10 = ssub.s32 1, %s8
  %s11 = scalar_select 0, %s10, %s8
  $region1: #{tpu_custom_call.1} parent=0
    #allocation2 [shape = 'u8[8192]{0}', space=vmem, size = 0x2000, scoped, tag = 'input window, operand 0, single buffered']
    #allocation3 [shape = 's32[1]{0}', space=sflag, size = 0x4, scoped, tag = 'scoped memory for tpu_custom_call.1']
    #allocation4 [shape = 's32[1]{0}', space=sflag, size = 0x4, scoped, tag = 'scoped memory for tpu_custom_call.1']
    #allocation5 [shape = 'u8[16384]{0}', space=vmem, size = 0x4000, scoped, tag = 'input window, operand 1, single buffered']
    #allocation6 [shape = 's32[1]{0}', space=sflag, size = 0x4, scoped, tag = 'scoped memory for tpu_custom_call.1']
    #allocation7 [shape = 'u8[16384]{0}', space=vmem, size = 0x4000, scoped, tag = 'input window, operand 2, single buffered']
    #allocation8 [shape = 'u8[16384]{0}', space=vmem, size = 0x4000, scoped, tag = 'input window, operand 3, single buffered']
    #allocation9 [shape = 's32[1]{0}', space=sflag, size = 0x4, scoped, tag = 'scoped memory for tpu_custom_call.1']
    #allocation10 [shape = 'u8[2048]{0}', space=vmem, size = 0x800, scoped, tag = 'output window, operand 0, single buffered']
    %12 = vsyncpa [#allocation3], 0
    %13 = vsyncpa [#allocation6], 0
    %14 = vsyncpa [#allocation9], 0
    %15 = vsyncpa [#allocation4], 0
    // Predicated region
    $region2: #{tpu_custom_call.1} parent=1 // pred_check
      _
    $region3: #{tpu_custom_call.1} parent=1 // pred_check_branch
      %17 = sbr.rel (0) target = $region5
    $region4: #{tpu_custom_call.1} parent=1 // pred_region
      %s19 = ssub.s32 256, 256
      %20 = vsyncadd [#allocation3], %s19
      %s21 = sshll.u32 [#allocation2], 4
      %s22 = int_to_ptr.vmem [resolvable:$true] %s21
      %27 = dma.hbm_to_vmem [thread:$0]  %s0, 256, %s22, [#allocation3], 128, 128, 8
    $region5: #{tpu_custom_call.1} parent=1 // pred_fallthru
      _
    // Predicated region
    $region6: #{tpu_custom_call.1} parent=1 // pred_check
      _
    $region7: #{tpu_custom_call.1} parent=1 // pred_check_branch
      %29 = sbr.rel (0) target = $region9
    $region8: #{tpu_custom_call.1} parent=1 // pred_region
      %s31 = ssub.s32 512, 512
      %32 = vsyncadd [#allocation6], %s31
      %s33 = sshll.u32 [#allocation5], 4
      %s34 = int_to_ptr.vmem [resolvable:$true] %s33
      %39 = dma.hbm_to_vmem [thread:$0]  %s1, 512, %s34, [#allocation6], 128, 128, 8
    $region9: #{tpu_custom_call.1} parent=1 // pred_fallthru
      _
    // Predicated region
    $region10: #{tpu_custom_call.1} parent=1 // pred_check
      _
    $region11: #{tpu_custom_call.1} parent=1 // pred_check_branch
      %41 = sbr.rel (0) target = $region13
    $region12: #{tpu_custom_call.1} parent=1 // pred_region
      %s43 = ssub.s32 512, 512
      %44 = vsyncadd [#allocation6], %s43
      %s45 = sshll.u32 [#allocation7], 4
      %s46 = int_to_ptr.vmem [resolvable:$true] %s45
      %51 = dma.hbm_to_vmem [thread:$0]  %s2, 512, %s46, [#allocation6], 128, 128, 8
    $region13: #{tpu_custom_call.1} parent=1 // pred_fallthru
      _
    // Predicated region
    $region14: #{tpu_custom_call.1} parent=1 // pred_check
      _
    $region15: #{tpu_custom_call.1} parent=1 // pred_check_branch
      %53 = sbr.rel (0) target = $region17
    $region16: #{tpu_custom_call.1} parent=1 // pred_region
      %s55 = ssub.s32 512, 512
      %56 = vsyncadd [#allocation9], %s55
      %s57 = sshll.u32 [#allocation8], 4
      %s58 = int_to_ptr.vmem [resolvable:$true] %s57
      %63 = dma.hbm_to_vmem [thread:$0]  %s3, 512, %s58, [#allocation9], 128, 128, 8
    $region17: #{tpu_custom_call.1} parent=1 // pred_fallthru
      _
    // Predicated region
    $region18: #{tpu_custom_call.1} parent=1 // pred_check
      _
    $region19: #{tpu_custom_call.1} parent=1 // pred_check_branch
      %65 = sbr.rel (0) target = $region21
    $region20: #{tpu_custom_call.1} parent=1 // pred_region
      _
    $region21: #{tpu_custom_call.1} parent=1 // pred_fallthru
      _
    // Predicated region
    $region22: #{tpu_custom_call.1} parent=1 // pred_check
      _
    $region23: #{tpu_custom_call.1} parent=1 // pred_check_branch
      %67 = sbr.rel (0) target = $region25
    $region24: #{tpu_custom_call.1} parent=1 // pred_region
      _
    $region25: #{tpu_custom_call.1} parent=1 // pred_fallthru
      _
    // Predicated region
    $region26: #{tpu_custom_call.1} parent=1 // pred_check
      _
    $region27: #{tpu_custom_call.1} parent=1 // pred_check_branch
      %69 = sbr.rel (0) target = $region29
    $region28: #{tpu_custom_call.1} parent=1 // pred_region
      _
    $region29: #{tpu_custom_call.1} parent=1 // pred_fallthru
      _
    // Predicated region
    $region30: #{tpu_custom_call.1} parent=1 // pred_check
      _
    $region31: #{tpu_custom_call.1} parent=1 // pred_check_branch
      %71 = sbr.rel (0) target = $region33
    $region32: #{tpu_custom_call.1} parent=1 // pred_region
      %72 = dma.done [#allocation3], 256
    $region33: #{tpu_custom_call.1} parent=1 // pred_fallthru
      _
    // Predicated region
    $region34: #{tpu_custom_call.1} parent=1 // pred_check
      _
    $region35: #{tpu_custom_call.1} parent=1 // pred_check_branch
      %74 = sbr.rel (0) target = $region37
    $region36: #{tpu_custom_call.1} parent=1 // pred_region
      %75 = dma.done [#allocation6], 512
    $region37: #{tpu_custom_call.1} parent=1 // pred_fallthru
      _
    // Predicated region
    $region38: #{tpu_custom_call.1} parent=1 // pred_check
      _
    $region39: #{tpu_custom_call.1} parent=1 // pred_check_branch
      %77 = sbr.rel (0) target = $region41
    $region40: #{tpu_custom_call.1} parent=1 // pred_region
      %78 = dma.done [#allocation6], 512
    $region41: #{tpu_custom_call.1} parent=1 // pred_fallthru
      _
    // Predicated region
    $region42: #{tpu_custom_call.1} parent=1 // pred_check
      _
    $region43: #{tpu_custom_call.1} parent=1 // pred_check_branch
      %80 = sbr.rel (0) target = $region45
    $region44: #{tpu_custom_call.1} parent=1 // pred_region
      %81 = dma.done [#allocation9], 512
    $region45: #{tpu_custom_call.1} parent=1 // pred_fallthru
      _
    %v82 = vld [vmem:[#allocation2] sm:$0xff]
    %v83 = vld [vmem:[#allocation2 + $0x8] sm:$0xff]
    %v84 = vld [vmem:[#allocation5] sm:$0xff]
    %v85 = vld [vmem:[#allocation5 + $0x8] sm:$0xff]
    %v86 = vld [vmem:[#allocation5 + $0x10] sm:$0xff]
    %v87 = vld [vmem:[#allocation5 + $0x18] sm:$0xff]
    %v88 = vld [vmem:[%s4] sm:$0x1]
    %v90 = vlaneseq
    %v91 = vshrl.u32 %v90, 7
    %v92 = vsub.s32 0, %v91
    %v93 = vrot.slane %v88, %v92
    %vm95 = vcmask 261120
    %v97 = vsel %vm95, %v82, 0
    %v100 = vsel %vm95, %v83, 0
    %102 = vmatprep.subr.mxu0 0.0
    %103 = vmatpush1.msra.mxu0 0.0
    %104 = vmatprep.subr.mxu0 0.0
    %105 = vmatpush1.msra.mxu0 0.0
    %106 = vmatprep.subr.mxu0 0.0
    %107 = vmatpush1.msra.mxu0 0.0
    %108 = vmatprep.subr.mxu0 0.0
    %109 = vmatpush1.msra.mxu0 0.0
    %110 = vmatprep.subr.mxu0 0.0
    %111 = vmatpush1.msra.mxu0 0.0
    %112 = vmatprep.subr.mxu0 0.0
    %113 = vmatpush1.msra.mxu0 0.0
    %114 = vmatprep.subr.mxu0 0.0
    %115 = vmatpush1.msra.mxu0 0.0
    %116 = vmatprep.subr.mxu0 0.0
    %117 = vmatpush1.msra.mxu0 0.0
    %118 = vmatprep.subr.mxu0 0.0
    %119 = vmatpush1.msra.mxu0 0.0
    %120 = vmatprep.subr.mxu0 0.0
    %121 = vmatpush1.msra.mxu0 0.0
    %122 = vmatprep.subr.mxu0 0.0
    %123 = vmatpush1.msra.mxu0 0.0
    %124 = vmatprep.subr.mxu0 0.0
    %125 = vmatpush1.msra.mxu0 0.0
    %126 = vmatprep.subr.mxu0 0.0
    %127 = vmatpush1.msra.mxu0 %v87
    %128 = vmatprep.subr.mxu0 0.0
    %129 = vmatpush1.msra.mxu0 %v86
    %130 = vmatprep.subr.mxu0 0.0
    %131 = vmatpush1.msra.mxu0 %v85
    %132 = vmatprep.subr.mxu0 0.0
    %133 = vmatpush1.msra.mxu0 %v84
    %134 = vmatprep.subr.mxu0 0.0
    %135 = vmatpush2.msra.mxu0 0.0
    %136 = vmatprep.subr.mxu0 0.0
    %137 = vmatpush2.msra.mxu0 0.0
    %138 = vmatprep.subr.mxu0 0.0
    %139 = vmatpush2.msra.mxu0 0.0
    %140 = vmatprep.subr.mxu0 0.0
    %141 = vmatpush2.msra.mxu0 0.0
    %142 = vmatprep.subr.mxu0 0.0
    %143 = vmatpush2.msra.mxu0 0.0
    %144 = vmatprep.subr.mxu0 0.0
    %145 = vmatpush2.msra.mxu0 0.0
    %146 = vmatprep.subr.mxu0 0.0
    %147 = vmatpush2.msra.mxu0 0.0
    %148 = vmatprep.subr.mxu0 0.0
    %149 = vmatpush2.msra.mxu0 0.0
    %150 = vmatprep.subr.mxu0 0.0
    %151 = vmatpush2.msra.mxu0 0.0
    %152 = vmatprep.subr.mxu0 0.0
    %153 = vmatpush2.msra.mxu0 0.0
    %154 = vmatprep.subr.mxu0 0.0
    %155 = vmatpush2.msra.mxu0 0.0
    %156 = vmatprep.subr.mxu0 0.0
    %157 = vmatpush2.msra.mxu0 0.0
    %158 = vmatprep.subr.mxu0 0.0
    %159 = vmatpush2.msra.mxu0 0.0
    %160 = vmatprep.subr.mxu0 0.0
    %161 = vmatpush2.msra.mxu0 0.0
    %162 = vmatprep.subr.mxu0 0.0
    %163 = vmatpush2.msra.mxu0 0.0
    %164 = vmatprep.subr.mxu0 0.0
    %165 = vmatpush2.msra.mxu0 0.0
    %166 = vmatprep.mubr.f32.mxu0 0.0
    %167 = vmatmul.mubr.f32.gmra.mxu0 %v97
    %v168 = vpop.f32.mrf.mxu0
    %v169 = vadd.f32 %v93, %v168
    %v170 = vpop.f32.mrf.mxu0
    %171 = vmatprep.mubr.f32.mxu0 0.0
    %172 = vmatmul.mubr.f32.gmra.mxu0 %v100
    %v173 = vpop.f32.mrf.mxu0
    %v174 = vadd.f32 %v93, %v173
    %v175 = vpop.f32.mrf.mxu0
    %176 = vdwg.mxu0
    %v177 = vld [vmem:[#allocation7] sm:$0xff]
    %v178 = vld [vmem:[#allocation7 + $0x8] sm:$0xff]
    %v179 = vld [vmem:[#allocation7 + $0x10] sm:$0xff]
    %v180 = vld [vmem:[#allocation7 + $0x18] sm:$0xff]
    %v181 = vld [vmem:[%s5] sm:$0x1]
    %v183 = vlaneseq
    %v184 = vshrl.u32 %v183, 7
    %v185 = vsub.s32 0, %v184
    %v186 = vrot.slane %v181, %v185
    %188 = vmatprep.subr.mxu0 0.0
    %189 = vmatpush1.msra.mxu0 0.0
    %190 = vmatprep.subr.mxu0 0.0
    %191 = vmatpush1.msra.mxu0 0.0
    %192 = vmatprep.subr.mxu0 0.0
    %193 = vmatpush1.msra.mxu0 0.0
    %194 = vmatprep.subr.mxu0 0.0
    %195 = vmatpush1.msra.mxu0 0.0
    %196 = vmatprep.subr.mxu0 0.0
    %197 = vmatpush1.msra.mxu0 0.0
    %198 = vmatprep.subr.mxu0 0.0
    %199 = vmatpush1.msra.mxu0 0.0
    %200 = vmatprep.subr.mxu0 0.0
    %201 = vmatpush1.msra.mxu0 0.0
    %202 = vmatprep.subr.mxu0 0.0
    %203 = vmatpush1.msra.mxu0 0.0
    %204 = vmatprep.subr.mxu0 0.0
    %205 = vmatpush1.msra.mxu0 0.0
    %206 = vmatprep.subr.mxu0 0.0
    %207 = vmatpush1.msra.mxu0 0.0
    %208 = vmatprep.subr.mxu0 0.0
    %209 = vmatpush1.msra.mxu0 0.0
    %210 = vmatprep.subr.mxu0 0.0
    %211 = vmatpush1.msra.mxu0 0.0
    %212 = vmatprep.subr.mxu0 0.0
    %213 = vmatpush1.msra.mxu0 %v180
    %214 = vmatprep.subr.mxu0 0.0
    %215 = vmatpush1.msra.mxu0 %v179
    %216 = vmatprep.subr.mxu0 0.0
    %217 = vmatpush1.msra.mxu0 %v178
    %218 = vmatprep.subr.mxu0 0.0
    %219 = vmatpush1.msra.mxu0 %v177
    %220 = vmatprep.subr.mxu0 0.0
    %221 = vmatpush2.msra.mxu0 0.0
    %222 = vmatprep.subr.mxu0 0.0
    %223 = vmatpush2.msra.mxu0 0.0
    %224 = vmatprep.subr.mxu0 0.0
    %225 = vmatpush2.msra.mxu0 0.0
    %226 = vmatprep.subr.mxu0 0.0
    %227 = vmatpush2.msra.mxu0 0.0
    %228 = vmatprep.subr.mxu0 0.0
    %229 = vmatpush2.msra.mxu0 0.0
    %230 = vmatprep.subr.mxu0 0.0
    %231 = vmatpush2.msra.mxu0 0.0
    %232 = vmatprep.subr.mxu0 0.0
    %233 = vmatpush2.msra.mxu0 0.0
    %234 = vmatprep.subr.mxu0 0.0
    %235 = vmatpush2.msra.mxu0 0.0
    %236 = vmatprep.subr.mxu0 0.0
    %237 = vmatpush2.msra.mxu0 0.0
    %238 = vmatprep.subr.mxu0 0.0
    %239 = vmatpush2.msra.mxu0 0.0
    %240 = vmatprep.subr.mxu0 0.0
    %241 = vmatpush2.msra.mxu0 0.0
    %242 = vmatprep.subr.mxu0 0.0
    %243 = vmatpush2.msra.mxu0 0.0
    %244 = vmatprep.subr.mxu0 0.0
    %245 = vmatpush2.msra.mxu0 0.0
    %246 = vmatprep.subr.mxu0 0.0
    %247 = vmatpush2.msra.mxu0 0.0
    %248 = vmatprep.subr.mxu0 0.0
    %249 = vmatpush2.msra.mxu0 0.0
    %250 = vmatprep.subr.mxu0 0.0
    %251 = vmatpush2.msra.mxu0 0.0
    %252 = vmatprep.mubr.f32.mxu0 0.0
    %253 = vmatmul.mubr.f32.gmra.mxu0 %v97
    %v254 = vpop.f32.mrf.mxu0
    %v255 = vadd.f32 %v186, %v254
    %v256 = vpop.f32.mrf.mxu0
    %257 = vmatprep.mubr.f32.mxu0 0.0
    %258 = vmatmul.mubr.f32.gmra.mxu0 %v100
    %v259 = vpop.f32.mrf.mxu0
    %v260 = vadd.f32 %v186, %v259
    %v261 = vpop.f32.mrf.mxu0
    %262 = vdwg.mxu0
    %v263 = vld [vmem:[#allocation8] sm:$0xff]
    %v264 = vld [vmem:[#allocation8 + $0x8] sm:$0xff]
    %v265 = vld [vmem:[#allocation8 + $0x10] sm:$0xff]
    %v266 = vld [vmem:[#allocation8 + $0x18] sm:$0xff]
    %v267 = vld [vmem:[%s6] sm:$0x1]
    %v269 = vlaneseq
    %v270 = vshrl.u32 %v269, 7
    %v271 = vsub.s32 0, %v270
    %v272 = vrot.slane %v267, %v271
    %274 = vmatprep.subr.mxu0 0.0
    %275 = vmatpush1.msra.mxu0 0.0
    %276 = vmatprep.subr.mxu0 0.0
    %277 = vmatpush1.msra.mxu0 0.0
    %278 = vmatprep.subr.mxu0 0.0
    %279 = vmatpush1.msra.mxu0 0.0
    %280 = vmatprep.subr.mxu0 0.0
    %281 = vmatpush1.msra.mxu0 0.0
    %282 = vmatprep.subr.mxu0 0.0
    %283 = vmatpush1.msra.mxu0 0.0
    %284 = vmatprep.subr.mxu0 0.0
    %285 = vmatpush1.msra.mxu0 0.0
    %286 = vmatprep.subr.mxu0 0.0
    %287 = vmatpush1.msra.mxu0 0.0
    %288 = vmatprep.subr.mxu0 0.0
    %289 = vmatpush1.msra.mxu0 0.0
    %290 = vmatprep.subr.mxu0 0.0
    %291 = vmatpush1.msra.mxu0 0.0
    %292 = vmatprep.subr.mxu0 0.0
    %293 = vmatpush1.msra.mxu0 0.0
    %294 = vmatprep.subr.mxu0 0.0
    %295 = vmatpush1.msra.mxu0 0.0
    %296 = vmatprep.subr.mxu0 0.0
    %297 = vmatpush1.msra.mxu0 0.0
    %298 = vmatprep.subr.mxu0 0.0
    %299 = vmatpush1.msra.mxu0 %v266
    %300 = vmatprep.subr.mxu0 0.0
    %301 = vmatpush1.msra.mxu0 %v265
    %302 = vmatprep.subr.mxu0 0.0
    %303 = vmatpush1.msra.mxu0 %v264
    %304 = vmatprep.subr.mxu0 0.0
    %305 = vmatpush1.msra.mxu0 %v263
    %306 = vmatprep.subr.mxu0 0.0
    %307 = vmatpush2.msra.mxu0 0.0
    %308 = vmatprep.subr.mxu0 0.0
    %309 = vmatpush2.msra.mxu0 0.0
    %310 = vmatprep.subr.mxu0 0.0
    %311 = vmatpush2.msra.mxu0 0.0
    %312 = vmatprep.subr.mxu0 0.0
    %313 = vmatpush2.msra.mxu0 0.0
    %314 = vmatprep.subr.mxu0 0.0
    %315 = vmatpush2.msra.mxu0 0.0
    %316 = vmatprep.subr.mxu0 0.0
    %317 = vmatpush2.msra.mxu0 0.0
    %318 = vmatprep.subr.mxu0 0.0
    %319 = vmatpush2.msra.mxu0 0.0
    %320 = vmatprep.subr.mxu0 0.0
    %321 = vmatpush2.msra.mxu0 0.0
    %322 = vmatprep.subr.mxu0 0.0
    %323 = vmatpush2.msra.mxu0 0.0
    %324 = vmatprep.subr.mxu0 0.0
    %325 = vmatpush2.msra.mxu0 0.0
    %326 = vmatprep.subr.mxu0 0.0
    %327 = vmatpush2.msra.mxu0 0.0
    %328 = vmatprep.subr.mxu0 0.0
    %329 = vmatpush2.msra.mxu0 0.0
    %330 = vmatprep.subr.mxu0 0.0
    %331 = vmatpush2.msra.mxu0 0.0
    %332 = vmatprep.subr.mxu0 0.0
    %333 = vmatpush2.msra.mxu0 0.0
    %334 = vmatprep.subr.mxu0 0.0
    %335 = vmatpush2.msra.mxu0 0.0
    %336 = vmatprep.subr.mxu0 0.0
    %337 = vmatpush2.msra.mxu0 0.0
    %338 = vmatprep.mubr.f32.mxu0 0.0
    %339 = vmatmul.mubr.f32.gmra.mxu0 %v97
    %v340 = vpop.f32.mrf.mxu0
    %v341 = vadd.f32 %v272, %v340
    %v342 = vpop.f32.mrf.mxu0
    %343 = vmatprep.mubr.f32.mxu0 0.0
    %344 = vmatmul.mubr.f32.gmra.mxu0 %v100
    %v345 = vpop.f32.mrf.mxu0
    %v346 = vadd.f32 %v272, %v345
    %v347 = vpop.f32.mrf.mxu0
    %348 = vdwg.mxu0
    %v350 = vsel %vm95, %v169, 0
    %v353 = vsel %vm95, %v255, 0
    %355 = vmatprep.subr.mxu0 0.0
    %356 = vmatpush1.xpose.msra.mxu0 0.0
    %357 = vmatprep.subr.mxu0 0.0
    %358 = vmatpush1.xpose.msra.mxu0 0.0
    %359 = vmatprep.subr.mxu0 0.0
    %360 = vmatpush1.xpose.msra.mxu0 0.0
    %361 = vmatprep.subr.mxu0 0.0
    %362 = vmatpush1.xpose.msra.mxu0 0.0
    %363 = vmatprep.subr.mxu0 0.0
    %364 = vmatpush1.xpose.msra.mxu0 0.0
    %365 = vmatprep.subr.mxu0 0.0
    %366 = vmatpush1.xpose.msra.mxu0 0.0
    %367 = vmatprep.subr.mxu0 0.0
    %368 = vmatpush1.xpose.msra.mxu0 0.0
    %369 = vmatprep.subr.mxu0 0.0
    %370 = vmatpush1.xpose.msra.mxu0 0.0
    %371 = vmatprep.subr.mxu0 0.0
    %372 = vmatpush1.xpose.msra.mxu0 0.0
    %373 = vmatprep.subr.mxu0 0.0
    %374 = vmatpush1.xpose.msra.mxu0 0.0
    %375 = vmatprep.subr.mxu0 0.0
    %376 = vmatpush1.xpose.msra.mxu0 0.0
    %377 = vmatprep.subr.mxu0 0.0
    %378 = vmatpush1.xpose.msra.mxu0 0.0
    %379 = vmatprep.subr.mxu0 0.0
    %380 = vmatpush1.xpose.msra.mxu0 0.0
    %381 = vmatprep.subr.mxu0 0.0
    %382 = vmatpush1.xpose.msra.mxu0 0.0
    %383 = vmatprep.subr.mxu0 0.0
    %384 = vmatpush1.xpose.msra.mxu0 0.0
    %385 = vmatprep.subr.mxu0 0.0
    %386 = vmatpush1.xpose.msra.mxu0 %v353
    %387 = vmatprep.subr.mxu0 0.0
    %388 = vmatpush2.xpose.msra.mxu0 0.0
    %389 = vmatprep.subr.mxu0 0.0
    %390 = vmatpush2.xpose.msra.mxu0 0.0
    %391 = vmatprep.subr.mxu0 0.0
    %392 = vmatpush2.xpose.msra.mxu0 0.0
    %393 = vmatprep.subr.mxu0 0.0
    %394 = vmatpush2.xpose.msra.mxu0 0.0
    %395 = vmatprep.subr.mxu0 0.0
    %396 = vmatpush2.xpose.msra.mxu0 0.0
    %397 = vmatprep.subr.mxu0 0.0
    %398 = vmatpush2.xpose.msra.mxu0 0.0
    %399 = vmatprep.subr.mxu0 0.0
    %400 = vmatpush2.xpose.msra.mxu0 0.0
    %401 = vmatprep.subr.mxu0 0.0
    %402 = vmatpush2.xpose.msra.mxu0 0.0
    %403 = vmatprep.subr.mxu0 0.0
    %404 = vmatpush2.xpose.msra.mxu0 0.0
    %405 = vmatprep.subr.mxu0 0.0
    %406 = vmatpush2.xpose.msra.mxu0 0.0
    %407 = vmatprep.subr.mxu0 0.0
    %408 = vmatpush2.xpose.msra.mxu0 0.0
    %409 = vmatprep.subr.mxu0 0.0
    %410 = vmatpush2.xpose.msra.mxu0 0.0
    %411 = vmatprep.subr.mxu0 0.0
    %412 = vmatpush2.xpose.msra.mxu0 0.0
    %413 = vmatprep.subr.mxu0 0.0
    %414 = vmatpush2.xpose.msra.mxu0 0.0
    %415 = vmatprep.subr.mxu0 0.0
    %416 = vmatpush2.xpose.msra.mxu0 0.0
    %417 = vmatprep.subr.mxu0 0.0
    %418 = vmatpush2.xpose.msra.mxu0 0.0
    %419 = vmatprep.mubr.f32.mxu0 0.0
    %420 = vmatmul.mubr.f32.gmra.mxu0 %v350
    %v421 = vpop.f32.mrf.mxu0
    %v422 = vadd.f32 0.0, %v421
    %v423 = vpop.f32.mrf.mxu0
    %424 = vdwg.mxu0
    %v426 = vsel %vm95, %v174, 0
    %v429 = vsel %vm95, %v260, 0
    %431 = vmatprep.subr.mxu0 0.0
    %432 = vmatpush1.xpose.msra.mxu0 0.0
    %433 = vmatprep.subr.mxu0 0.0
    %434 = vmatpush1.xpose.msra.mxu0 0.0
    %435 = vmatprep.subr.mxu0 0.0
    %436 = vmatpush1.xpose.msra.mxu0 0.0
    %437 = vmatprep.subr.mxu0 0.0
    %438 = vmatpush1.xpose.msra.mxu0 0.0
    %439 = vmatprep.subr.mxu0 0.0
    %440 = vmatpush1.xpose.msra.mxu0 0.0
    %441 = vmatprep.subr.mxu0 0.0
    %442 = vmatpush1.xpose.msra.mxu0 0.0
    %443 = vmatprep.subr.mxu0 0.0
    %444 = vmatpush1.xpose.msra.mxu0 0.0
    %445 = vmatprep.subr.mxu0 0.0
    %446 = vmatpush1.xpose.msra.mxu0 0.0
    %447 = vmatprep.subr.mxu0 0.0
    %448 = vmatpush1.xpose.msra.mxu0 0.0
    %449 = vmatprep.subr.mxu0 0.0
    %450 = vmatpush1.xpose.msra.mxu0 0.0
    %451 = vmatprep.subr.mxu0 0.0
    %452 = vmatpush1.xpose.msra.mxu0 0.0
    %453 = vmatprep.subr.mxu0 0.0
    %454 = vmatpush1.xpose.msra.mxu0 0.0
    %455 = vmatprep.subr.mxu0 0.0
    %456 = vmatpush1.xpose.msra.mxu0 0.0
    %457 = vmatprep.subr.mxu0 0.0
    %458 = vmatpush1.xpose.msra.mxu0 0.0
    %459 = vmatprep.subr.mxu0 0.0
    %460 = vmatpush1.xpose.msra.mxu0 0.0
    %461 = vmatprep.subr.mxu0 0.0
    %462 = vmatpush1.xpose.msra.mxu0 %v429
    %463 = vmatprep.subr.mxu0 0.0
    %464 = vmatpush2.xpose.msra.mxu0 0.0
    %465 = vmatprep.subr.mxu0 0.0
    %466 = vmatpush2.xpose.msra.mxu0 0.0
    %467 = vmatprep.subr.mxu0 0.0
    %468 = vmatpush2.xpose.msra.mxu0 0.0
    %469 = vmatprep.subr.mxu0 0.0
    %470 = vmatpush2.xpose.msra.mxu0 0.0
    %471 = vmatprep.subr.mxu0 0.0
    %472 = vmatpush2.xpose.msra.mxu0 0.0
    %473 = vmatprep.subr.mxu0 0.0
    %474 = vmatpush2.xpose.msra.mxu0 0.0
    %475 = vmatprep.subr.mxu0 0.0
    %476 = vmatpush2.xpose.msra.mxu0 0.0
    %477 = vmatprep.subr.mxu0 0.0
    %478 = vmatpush2.xpose.msra.mxu0 0.0
    %479 = vmatprep.subr.mxu0 0.0
    %480 = vmatpush2.xpose.msra.mxu0 0.0
    %481 = vmatprep.subr.mxu0 0.0
    %482 = vmatpush2.xpose.msra.mxu0 0.0
    %483 = vmatprep.subr.mxu0 0.0
    %484 = vmatpush2.xpose.msra.mxu0 0.0
    %485 = vmatprep.subr.mxu0 0.0
    %486 = vmatpush2.xpose.msra.mxu0 0.0
    %487 = vmatprep.subr.mxu0 0.0
    %488 = vmatpush2.xpose.msra.mxu0 0.0
    %489 = vmatprep.subr.mxu0 0.0
    %490 = vmatpush2.xpose.msra.mxu0 0.0
    %491 = vmatprep.subr.mxu0 0.0
    %492 = vmatpush2.xpose.msra.mxu0 0.0
    %493 = vmatprep.subr.mxu0 0.0
    %494 = vmatpush2.xpose.msra.mxu0 0.0
    %495 = vmatprep.mubr.f32.mxu0 0.0
    %496 = vmatmul.mubr.f32.gmra.mxu0 %v426
    %v497 = vpop.f32.mrf.mxu0
    %v498 = vadd.f32 0.0, %v497
    %v499 = vpop.f32.mrf.mxu0
    %500 = vdwg.mxu0
    %vm501 = vcmask 64512
    %v502 = vsel %vm501, %v422, -inf
    %503 = vmax.xlane.f32.xlu0 %v502
    %v504 = vpop.xlane.xlu0 %503
    %v505 = vsel %vm501, %v498, -inf
    %506 = vmax.xlane.f32.xlu0 %v505
    %v507 = vpop.xlane.xlu0 %506
    %v508 = vsub.f32 %v422, %v504
    %v509 = vsub.f32 %v498, %v507
    %v510 = vmul.f32 %v508, 1.442695
    %v511 = vpow.pop %v510
    %v512 = vmul.f32 %v509, 1.442695
    %v513 = vpow.pop %v512
    %v514 = vsel %vm501, %v511, 0.0
    %515 = vadd.xlane.f32.xlu0 %v514
    %v516 = vpop.xlane.xlu0 %515
    %v517 = vsel %vm501, %v513, 0.0
    %518 = vadd.xlane.f32.xlu0 %v517
    %v519 = vpop.xlane.xlu0 %518
    %v521 = vsel %vm501, %v511, 0
    %523 = vmatprep.subr.mxu0 0.0
    %524 = vmatpush1.msra.mxu0 0.0
    %525 = vmatprep.subr.mxu0 0.0
    %526 = vmatpush1.msra.mxu0 0.0
    %527 = vmatprep.subr.mxu0 0.0
    %528 = vmatpush1.msra.mxu0 0.0
    %529 = vmatprep.subr.mxu0 0.0
    %530 = vmatpush1.msra.mxu0 0.0
    %531 = vmatprep.subr.mxu0 0.0
    %532 = vmatpush1.msra.mxu0 0.0
    %533 = vmatprep.subr.mxu0 0.0
    %534 = vmatpush1.msra.mxu0 0.0
    %535 = vmatprep.subr.mxu0 0.0
    %536 = vmatpush1.msra.mxu0 0.0
    %537 = vmatprep.subr.mxu0 0.0
    %538 = vmatpush1.msra.mxu0 0.0
    %539 = vmatprep.subr.mxu0 0.0
    %540 = vmatpush1.msra.mxu0 0.0
    %541 = vmatprep.subr.mxu0 0.0
    %542 = vmatpush1.msra.mxu0 0.0
    %543 = vmatprep.subr.mxu0 0.0
    %544 = vmatpush1.msra.mxu0 0.0
    %545 = vmatprep.subr.mxu0 0.0
    %546 = vmatpush1.msra.mxu0 0.0
    %547 = vmatprep.subr.mxu0 0.0
    %548 = vmatpush1.msra.mxu0 0.0
    %549 = vmatprep.subr.mxu0 0.0
    %550 = vmatpush1.msra.mxu0 0.0
    %551 = vmatprep.subr.mxu0 0.0
    %552 = vmatpush1.msra.mxu0 0.0
    %553 = vmatprep.subr.mxu0 0.0
    %554 = vmatpush1.msra.mxu0 %v341
    %555 = vmatprep.subr.mxu0 0.0
    %556 = vmatpush2.msra.mxu0 0.0
    %557 = vmatprep.subr.mxu0 0.0
    %558 = vmatpush2.msra.mxu0 0.0
    %559 = vmatprep.subr.mxu0 0.0
    %560 = vmatpush2.msra.mxu0 0.0
    %561 = vmatprep.subr.mxu0 0.0
    %562 = vmatpush2.msra.mxu0 0.0
    %563 = vmatprep.subr.mxu0 0.0
    %564 = vmatpush2.msra.mxu0 0.0
    %565 = vmatprep.subr.mxu0 0.0
    %566 = vmatpush2.msra.mxu0 0.0
    %567 = vmatprep.subr.mxu0 0.0
    %568 = vmatpush2.msra.mxu0 0.0
    %569 = vmatprep.subr.mxu0 0.0
    %570 = vmatpush2.msra.mxu0 0.0
    %571 = vmatprep.subr.mxu0 0.0
    %572 = vmatpush2.msra.mxu0 0.0
    %573 = vmatprep.subr.mxu0 0.0
    %574 = vmatpush2.msra.mxu0 0.0
    %575 = vmatprep.subr.mxu0 0.0
    %576 = vmatpush2.msra.mxu0 0.0
    %577 = vmatprep.subr.mxu0 0.0
    %578 = vmatpush2.msra.mxu0 0.0
    %579 = vmatprep.subr.mxu0 0.0
    %580 = vmatpush2.msra.mxu0 0.0
    %581 = vmatprep.subr.mxu0 0.0
    %582 = vmatpush2.msra.mxu0 0.0
    %583 = vmatprep.subr.mxu0 0.0
    %584 = vmatpush2.msra.mxu0 0.0
    %585 = vmatprep.subr.mxu0 0.0
    %586 = vmatpush2.msra.mxu0 0.0
    %587 = vmatprep.mubr.f32.mxu0 0.0
    %588 = vmatmul.mubr.f32.gmra.mxu0 %v521
    %v589 = vpop.f32.mrf.mxu0
    %v590 = vadd.f32 0.0, %v589
    %v591 = vpop.f32.mrf.mxu0
    %592 = vdwg.mxu0
    %v594 = vsel %vm501, %v513, 0
    %596 = vmatprep.subr.mxu0 0.0
    %597 = vmatpush1.msra.mxu0 0.0
    %598 = vmatprep.subr.mxu0 0.0
    %599 = vmatpush1.msra.mxu0 0.0
    %600 = vmatprep.subr.mxu0 0.0
    %601 = vmatpush1.msra.mxu0 0.0
    %602 = vmatprep.subr.mxu0 0.0
    %603 = vmatpush1.msra.mxu0 0.0
    %604 = vmatprep.subr.mxu0 0.0
    %605 = vmatpush1.msra.mxu0 0.0
    %606 = vmatprep.subr.mxu0 0.0
    %607 = vmatpush1.msra.mxu0 0.0
    %608 = vmatprep.subr.mxu0 0.0
    %609 = vmatpush1.msra.mxu0 0.0
    %610 = vmatprep.subr.mxu0 0.0
    %611 = vmatpush1.msra.mxu0 0.0
    %612 = vmatprep.subr.mxu0 0.0
    %613 = vmatpush1.msra.mxu0 0.0
    %614 = vmatprep.subr.mxu0 0.0
    %615 = vmatpush1.msra.mxu0 0.0
    %616 = vmatprep.subr.mxu0 0.0
    %617 = vmatpush1.msra.mxu0 0.0
    %618 = vmatprep.subr.mxu0 0.0
    %619 = vmatpush1.msra.mxu0 0.0
    %620 = vmatprep.subr.mxu0 0.0
    %621 = vmatpush1.msra.mxu0 0.0
    %622 = vmatprep.subr.mxu0 0.0
    %623 = vmatpush1.msra.mxu0 0.0
    %624 = vmatprep.subr.mxu0 0.0
    %625 = vmatpush1.msra.mxu0 0.0
    %626 = vmatprep.subr.mxu0 0.0
    %627 = vmatpush1.msra.mxu0 %v346
    %628 = vmatprep.subr.mxu0 0.0
    %629 = vmatpush2.msra.mxu0 0.0
    %630 = vmatprep.subr.mxu0 0.0
    %631 = vmatpush2.msra.mxu0 0.0
    %632 = vmatprep.subr.mxu0 0.0
    %633 = vmatpush2.msra.mxu0 0.0
    %634 = vmatprep.subr.mxu0 0.0
    %635 = vmatpush2.msra.mxu0 0.0
    %636 = vmatprep.subr.mxu0 0.0
    %637 = vmatpush2.msra.mxu0 0.0
    %638 = vmatprep.subr.mxu0 0.0
    %639 = vmatpush2.msra.mxu0 0.0
    %640 = vmatprep.subr.mxu0 0.0
    %641 = vmatpush2.msra.mxu0 0.0
    %642 = vmatprep.subr.mxu0 0.0
    %643 = vmatpush2.msra.mxu0 0.0
    %644 = vmatprep.subr.mxu0 0.0
    %645 = vmatpush2.msra.mxu0 0.0
    %646 = vmatprep.subr.mxu0 0.0
    %647 = vmatpush2.msra.mxu0 0.0
    %648 = vmatprep.subr.mxu0 0.0
    %649 = vmatpush2.msra.mxu0 0.0
    %650 = vmatprep.subr.mxu0 0.0
    %651 = vmatpush2.msra.mxu0 0.0
    %652 = vmatprep.subr.mxu0 0.0
    %653 = vmatpush2.msra.mxu0 0.0
    %654 = vmatprep.subr.mxu0 0.0
    %655 = vmatpush2.msra.mxu0 0.0
    %656 = vmatprep.subr.mxu0 0.0
    %657 = vmatpush2.msra.mxu0 0.0
    %658 = vmatprep.subr.mxu0 0.0
    %659 = vmatpush2.msra.mxu0 0.0
    %660 = vmatprep.mubr.f32.mxu0 0.0
    %661 = vmatmul.mubr.f32.gmra.mxu0 %v594
    %v662 = vpop.f32.mrf.mxu0
    %v663 = vadd.f32 0.0, %v662
    %v664 = vpop.f32.mrf.mxu0
    %665 = vdwg.mxu0
    %v666 = vrcp.pop %v516
    %v667 = vrcp.pop %v519
    %v668 = vmul.f32 %v590, %v666
    %v669 = vmul.f32 %v663, %v667
    %v670 = vcombine.high %v668, 0.0
    %v672 = vunpack.c.l.s4 1983009808
    %v673 = vunpack.c.0.s8 %v672
    %v674 = vlaneseq
    %v675 = vshrl.u32 %v674, 7
    %v676 = vsub.s32 %v673, %v675
    %v677 = vrot.slane %v668, %v676
    %v679 = vunpack.c.l.s4 1983009808
    %v680 = vunpack.c.0.s8 %v679
    %v681 = vlaneseq
    %v682 = vshrl.u32 %v681, 7
    %v683 = vsub.s32 %v680, %v682
    %v684 = vrot.slane %v670, %v683
    %v685 = vcombine.high %v669, 0.0
    %v687 = vunpack.c.l.s4 1983009808
    %v688 = vunpack.c.0.s8 %v687
    %v689 = vlaneseq
    %v690 = vshrl.u32 %v689, 7
    %v691 = vsub.s32 %v688, %v690
    %v692 = vrot.slane %v669, %v691
    %v694 = vunpack.c.l.s4 1983009808
    %v695 = vunpack.c.0.s8 %v694
    %v696 = vlaneseq
    %v697 = vshrl.u32 %v696, 7
    %v698 = vsub.s32 %v695, %v697
    %v699 = vrot.slane %v685, %v698
    %v700 = vcombine.low %v677, %v692
    %v701 = vcombine.high %v677, %v692
    %v703 = vunpack.c.l.s4 1934713408
    %v704 = vunpack.c.0.s8 %v703
    %v705 = vlaneseq
    %v706 = vshrl.u32 %v705, 7
    %v707 = vsub.s32 %v704, %v706
    %v708 = vrot.slane %v700, %v707
    %v710 = vunpack.c.l.s4 1934713408
    %v711 = vunpack.c.0.s8 %v710
    %v712 = vlaneseq
    %v713 = vshrl.u32 %v712, 7
    %v714 = vsub.s32 %v711, %v713
    %v715 = vrot.slane %v701, %v714
    %v716 = vcombine.low %v684, %v699
    %v717 = vcombine.high %v684, %v699
    %v719 = vunpack.c.l.s4 1934713408
    %v720 = vunpack.c.0.s8 %v719
    %v721 = vlaneseq
    %v722 = vshrl.u32 %v721, 7
    %v723 = vsub.s32 %v720, %v722
    %v724 = vrot.slane %v716, %v723
    %v726 = vunpack.c.l.s4 1934713408
    %v727 = vunpack.c.0.s8 %v726
    %v728 = vlaneseq
    %v729 = vshrl.u32 %v728, 7
    %v730 = vsub.s32 %v727, %v729
    %v731 = vrot.slane %v717, %v730
    %v732 = vcombine.high %v708, 0.0
    %v733 = vcombine.high %v715, 0.0
    %v734 = vcombine.high %v724, 0.0
    %v735 = vcombine.high %v731, 0.0
    %737 = vrot.lane.b32.xlu0 %v732, 32
    %v738 = vpop.permute.xlu0 %737
    %741 = vrot.lane.b32.xlu0 %v715, 64
    %v742 = vpop.permute.xlu0 %741
    %745 = vrot.lane.b32.xlu0 %v733, 96
    %v746 = vpop.permute.xlu0 %745
    %749 = vrot.lane.b32.xlu0 %v734, 32
    %v750 = vpop.permute.xlu0 %749
    %753 = vrot.lane.b32.xlu0 %v731, 64
    %v754 = vpop.permute.xlu0 %753
    %757 = vrot.lane.b32.xlu0 %v735, 96
    %v758 = vpop.permute.xlu0 %757
    %v760 = vsel %vm95, %v708, %v738
    %vm761 = vcmask 523264
    %v762 = vsel %vm761, %v760, %v742
    %vm763 = vcmask 785408
    %v764 = vsel %vm763, %v762, %v746
    %v765 = vsel %vm95, %v724, %v750
    %v766 = vsel %vm761, %v765, %v754
    %v767 = vsel %vm763, %v766, %v758
    %v770 = vcombine.low %v764, %v767
    %v772 = vunpack.c.l.s4 1983009808
    %v773 = vunpack.c.0.s8 %v772
    %v774 = vlaneseq
    %v775 = vshrl.u32 %v774, 7
    %v776 = vsub.s32 %v773, %v775
    %v777 = vrot.slane %v770, %v776
    %779 = vst [vmem:[#allocation10] sm:$0xf] %v777
    // Predicated region
    $region46: #{tpu_custom_call.1} parent=1 // pred_check
      _
    $region47: #{tpu_custom_call.1} parent=1 // pred_check_branch
      %781 = sbr.rel (0) target = $region49
    $region48: #{tpu_custom_call.1} parent=1 // pred_region
      %s783 = ssub.s32 64, 64
      %784 = vsyncadd [#allocation4], %s783
      %s786 = sshll.u32 [#allocation10], 4
      %s787 = int_to_ptr.vmem [resolvable:$true] %s786
      %789 = dma.vmem_to_hbm [thread:$0]  %s787, 64, %s7, [#allocation4]
    $region49: #{tpu_custom_call.1} parent=1 // pred_fallthru
      _
    // Predicated region
    $region50: #{tpu_custom_call.1} parent=1 // pred_check
      _
    $region51: #{tpu_custom_call.1} parent=1 // pred_check_branch
      %791 = sbr.rel (0) target = $region53
    $region52: #{tpu_custom_call.1} parent=1 // pred_region
      %792 = dma.done [#allocation4], 64
    $region53: #{tpu_custom_call.1} parent=1 // pred_fallthru
      _
    %793 = vsyncpa [#allocation3], 1
    %794 = vsyncpa [#allocation6], 1
    %795 = vsyncpa [#allocation9], 1
    %796 = vsyncpa [#allocation4], 1

</llo_original>
